<compile_context>
chip_gen: v5e
topology: v5e:2x2
jax: 0.10.0
libtpu: 0.0.40
codegen_flags: <defaults>
</compile_context>

<pallas_src>
import jax
import jax.numpy as jnp
from jax.experimental import pallas as pl
from jax.experimental.pallas import tpu as pltpu


def _pos_embed_kernel(w_ref, o_ref):
    # w_ref: (rows, cols)      -- positional slab, fetched once (constant index map)
    # o_ref: (tb, rows, cols)  -- output block for this grid step
    o_ref[...] = jnp.broadcast_to(w_ref[...][None, :, :], o_ref.shape)


def _round_up(x, m):
    return ((x + m - 1) // m) * m


def _vmem_budget():
    """Return (target output-block bytes, scoped-VMEM cap) for this TPU gen."""
    try:
        vmem_cap = int(pltpu.get_tpu_info().vmem_capacity_bytes)
    except Exception:
        vmem_cap = 64 * 1024 * 1024            # conservative if query unavailable
    if vmem_cap <= 80 * 1024 * 1024:           # v7x-class: 64 MiB per TensorCore
        return 8 * 1024 * 1024, 40 * 1024 * 1024
    return 8 * 1024 * 1024, 96 * 1024 * 1024   # v5e / v6e: 128 MiB physical VMEM


def _pick_batch_tile(batch, block_row_bytes, target_bytes):
    """Largest divisor of `batch` whose output block is ~target_bytes.

    When batch >= 2 the tile is capped at batch//2 so the grid has at least
    two steps and the "parallel" axis can be sharded across both TensorCores
    on v7x (no-op cost elsewhere: one extra ~0.35 us grid step at most).
    """
    tb = max(1, min(batch, target_bytes // max(block_row_bytes, 1)))
    if batch >= 2:
        tb = min(tb, batch // 2)
    tb = max(tb, 1)
    while batch % tb != 0:
        tb -= 1
    return tb


def pos_embed(tokens, w_pos, *, target_block_bytes=None):
    """Pallas implementation of PosEmbed.forward.

    tokens: (batch, seq) integer array (only its shape is used).
    w_pos:  (n_ctx, d_model) positional embedding table.
    Returns (batch, seq, d_model) with the dtype of w_pos.
    """
    batch, seq = tokens.shape
    n_ctx, d_model = w_pos.shape
    if seq > n_ctx:
        raise ValueError(f"seq={seq} exceeds n_ctx={n_ctx}")

    dtype = w_pos.dtype
    itemsize = dtype.itemsize
    sublane = max(1, 32 // itemsize)      # 8 for f32, 16 for bf16, 32 for int8
    feat = seq * d_model

    default_target, vmem_cap_limit = _vmem_budget()
    if target_block_bytes is None:
        target_block_bytes = default_target

    # ---- layout selection -------------------------------------------------
    # d_model % 128 == 0  -> 3-D (tb, seq, d_model) blocks are already
    #                        lane-dense; do NOT flatten.
    # d_model % 128 != 0  -> fold (seq, d_model) into (rows, L), L a multiple
    #                        of 128 dividing feat, to keep stores unmasked
    #                        without sublane-padding the constant block.
    # neither possible    -> keep 3-D blocks (masked stores, still correct).
    fold_cols = None
    if d_model % 128 != 0:
        for cand in (512, 384, 256, 128):
            if feat % cand == 0:
                fold_cols = cand
                break

    if fold_cols is None:
        rows, cols = seq, d_model
        # Skip the XLA-side slice when a BlockSpec window on w_pos is legal:
        # last block dim is the full d_model; the second-to-last (seq) must be
        # a sublane multiple or equal to the full n_ctx.
        if seq == n_ctx or seq % sublane == 0:
            w_in = w_pos
        else:
            w_in = w_pos[:seq, :]
        needs_reshape = False
    else:
        rows, cols = feat // fold_cols, fold_cols
        w_in = w_pos[:seq, :].reshape(rows, cols)
        needs_reshape = True

    # Padded (VMEM-layout) size of one (rows, cols) slab.
    padded_row_bytes = _round_up(rows, sublane) * _round_up(cols, 128) * itemsize

    tb = _pick_batch_tile(batch, padded_row_bytes, target_block_bytes)
    grid = (batch // tb,)

    in_spec = pl.BlockSpec((rows, cols), lambda b: (0, 0))
    out_spec = pl.BlockSpec((tb, rows, cols), lambda b: (b, 0, 0))
    out_struct = jax.ShapeDtypeStruct((batch, rows, cols), dtype)

    # VMEM budget: the constant input gets 2 pipeline buffers (it is DMA'd
    # only once, but both buffers are allocated) plus 2 buffers for the output
    # block.  Use padded sizes, 2x headroom, per-generation cap, and never go
    # below the true footprint.
    vmem_need = 2 * padded_row_bytes + 2 * tb * padded_row_bytes
    vmem_limit = int(min(max(2 * vmem_need, 16 * 1024 * 1024), vmem_cap_limit))
    vmem_limit = int(max(vmem_limit, vmem_need))

    out = pl.pallas_call(
        _pos_embed_kernel,
        out_shape=out_struct,
        grid_spec=pltpu.PrefetchScalarGridSpec(
            num_scalar_prefetch=0,
            grid=grid,
            in_specs=[in_spec],
            out_specs=out_spec,
        ),
        compiler_params=pltpu.CompilerParams(
            dimension_semantics=("parallel",),
            vmem_limit_bytes=vmem_limit,
        ),
    )(w_in)

    if needs_reshape:
        out = out.reshape(batch, seq, d_model)
    return out


if __name__ == "__main__":
    key = jax.random.PRNGKey(0)
    k1, k2, k3, k4, k_tok = jax.random.split(key, 5)

    def check(batch, seq, n_ctx, d_model, k_w, **kwargs):
        w_pos = jax.random.normal(k_w, (n_ctx, d_model), dtype=jnp.float32)
        tokens = jax.random.randint(k_tok, (batch, seq), 0, n_ctx, dtype=jnp.int32)
        y = jax.block_until_ready(pos_embed(tokens, w_pos, **kwargs))
        y_ref = jnp.broadcast_to(w_pos[:seq, :][None, :, :], (batch, seq, d_model))
        assert y.shape == (batch, seq, d_model)
        assert y.dtype == w_pos.dtype
        assert bool(jnp.array_equal(y, y_ref))

    # Lane-dense 3-D path (d_model % 128 == 0); seq is a sublane multiple so
    # W_pos is windowed directly via BlockSpec (no wrapper-side slice).
    check(2, 8, 16, 128, k1)
    # Folded path: d_model not a lane multiple, seq*d_model % 128 == 0
    # -> (rows, L) fold keeps output stores lane-dense.
    check(4, 8, 16, 32, k2)
    # Ragged fallback: neither d_model nor seq*d_model is a lane multiple.
    check(2, 5, 16, 24, k3)
    # Multi-step batch-tiled grid (tiny block target forces several steps).
    check(16, 8, 16, 128, k4, target_block_bytes=8 * 1024)

    print("KERNEL_OK")
</pallas_src>

<mosaic_0001>
module attributes {stable_mosaic.version = 11 : i64} {
  func.func @_pos_embed_kernel(%arg0: i32, %arg1: memref<8x128xf32, #tpu.memory_space<vmem>>, %arg2: memref<1x8x128xf32, #tpu.memory_space<vmem>>) attributes {dimension_semantics = [#tpu.dimension_semantics<parallel>], iteration_bounds = array<i64: 2>, scalar_prefetch = 0 : i64, scratch_operands = 0 : i64, tpu.core_type = #tpu.core_type<tc>, window_params = [{transform_indices = @transform_0, window_bounds = array<i64: 8, 128>}, {transform_indices = @transform_1, window_bounds = array<i64: 1, 8, 128>}]} {
    %c0 = arith.constant 0 : index
    %c0_0 = arith.constant 0 : index
    %0 = vector.load %arg1[%c0, %c0_0] : memref<8x128xf32, #tpu.memory_space<vmem>>, vector<8x128xf32>
    %1 = vector.shape_cast %0 : vector<8x128xf32> to vector<1x8x128xf32>
    %c0_1 = arith.constant 0 : index
    %c0_2 = arith.constant 0 : index
    %c0_3 = arith.constant 0 : index
    %2 = vector.load %arg2[%c0_1, %c0_2, %c0_3] : memref<1x8x128xf32, #tpu.memory_space<vmem>>, vector<1x8x128xf32>
    tpu.vector_store %arg2[%c0_1, %c0_2, %c0_3], %1 {strides = array<i32>} : memref<1x8x128xf32, #tpu.memory_space<vmem>>, vector<1x8x128xf32>,
    return
  }
  func.func @transform_0(%arg0: i32) -> (i32, i32) {
    %c0_i32 = arith.constant 0 : i32
    %c0_i32_0 = arith.constant 0 : i32
    %c0_i32_1 = arith.constant 0 : i32
    return %c0_i32, %c0_i32_0 : i32, i32
  }
  func.func @transform_1(%arg0: i32) -> (i32, i32, i32) {
    %c0_i32 = arith.constant 0 : i32
    %c0_i32_0 = arith.constant 0 : i32
    %c0_i32_1 = arith.constant 0 : i32
    return %arg0, %c0_i32, %c0_i32_0 : i32, i32, i32
  }
}

</mosaic_0001>

<llo_original>
// kernel: tpu_custom_call.1
$region0: #{tpu_custom_call.1}
  #allocation0 [shape = 'u32[]', space=smem, size = 0x4, offset = 0x4, fixed_abs, tag = 'smem constant byte address 0x4 - core index']
  #allocation1 [shape = 'u32[72,128]{1,0:T(1,128)}', space=vmem, size = 0x9000, scoped, tag = 'internal scratch']
  %s0 = inlined_call_operand.hbm [shape: f32[16,128], index: 0, kind: input, shape index: {}]
  %s1 = inlined_call_operand.hbm [shape: f32[2,8,128], index: 1, kind: output, shape index: {}]
  %s2 = sld [smem:[#allocation0]]
  $region41: #{tpu_custom_call.1} parent=0
    _
  %s4 = ssub.s32 1, %s2
  %s5 = scalar_select 0, %s4, %s2
  $region1: #{tpu_custom_call.1} parent=0
    #allocation2 [shape = 'u8[4096]{0}', space=vmem, size = 0x1000, scoped, tag = 'input window, operand 0, single buffered']
    #allocation3 [shape = 's32[2]{0}', space=sflag, size = 0x8, scoped, tag = 'scoped memory for tpu_custom_call.1']
    #allocation4 [shape = 's32[2]{0}', space=sflag, size = 0x8, scoped, tag = 'scoped memory for tpu_custom_call.1']
    #allocation5 [shape = 'u8[8192]{0}', space=vmem, size = 0x2000, scoped, tag = 'output window, operand 0']
    %6 = vsyncpa [#allocation3], 0
    %7 = vsyncpa [#allocation4], 0
    %s8 = scalar_lea.sflag [#allocation4], 1
    %9 = vsyncpa %s8, 0
    loop: start=0, step=1, limit=4
    $region2: #{tpu_custom_call.1} parent=1 // loop_pre_header
      _
    $region3: #{tpu_custom_call.1} parent=1 // loop_header
      %s11 = sphi 0, %s15
      %p12 = scmp.ge.s32.totalorder %s11, 4
      %s19 = sphi 0, %s19
      %s21 = sphi 0, %s19
      %s22 = sphi 0, %s21
      %s36 = sphi 0, %s22
      %s42 = sphi 0, %s44
      %s45 = sphi 0, %s42
      %s46 = sphi 0, %s45
      %s62 = sphi 0, %s46
    $region4: #{tpu_custom_call.1} parent=1 // loop_header_branch
      %14 = sbr.rel (%p12) target = $region8
    $region5: #{tpu_custom_call.1} parent=1 // loop_body
      %s16 = ssub.s32 %s11, 1
      %s17 = ssub.s32 %s11, 2
      %s18 = sadd.s32 %s11, 1
      %s20 = sadd.s32 %s19, 1
      %p23 = scmp.eq.s32.totalorder %s11, 1
      %p24 = scmp.ne.s32.totalorder %s19, %s21
      %p25 = scmp.eq.s32.totalorder %s11, 0
      %p26 = por %p24, %p25
      %p27 = scmp.ne.s32.totalorder %s19, %s21
      %p28 = scmp.eq.s32.totalorder %s16, 1
      %p29 = por %p27, %p28
      %p30 = scmp.ne.s32.totalorder %s21, %s22
      %p31 = scmp.eq.s32.totalorder %s16, 0
      %p32 = por %p30, %p31
      %p33 = scmp.ne.s32.totalorder %s21, %s22
      %p34 = scmp.eq.s32.totalorder %s17, 1
      %p35 = por %p33, %p34
      %p37 = scmp.ne.s32.totalorder %s22, %s36
      %p38 = scmp.eq.s32.totalorder %s17, 0
      %p39 = por %p37, %p38
      %s40 = ssub.s32 %s11, %s18
      %p41 = scmp.eq.s32.totalorder %s40, 0
      %s43 = sadd.s32 %s42, 1
      %s44 = scalar_select %p41, %s42, %s43
      %p47 = pneg %p41
      %p48 = scmp.eq.s32.totalorder %s11, 1
      %p49 = por %p47, %p48
      %p50 = scmp.ne.s32.totalorder %s42, %s45
      %p51 = scmp.eq.s32.totalorder %s11, 0
      %p52 = por %p50, %p51
      %p53 = scmp.ne.s32.totalorder %s42, %s45
      %p54 = scmp.eq.s32.totalorder %s16, 1
      %p55 = por %p53, %p54
      %p56 = scmp.ne.s32.totalorder %s45, %s46
      %p57 = scmp.eq.s32.totalorder %s16, 0
      %p58 = por %p56, %p57
      %p59 = scmp.ne.s32.totalorder %s45, %s46
      %p60 = scmp.eq.s32.totalorder %s17, 1
      %p61 = por %p59, %p60
      %p63 = scmp.ne.s32.totalorder %s46, %s62
      %p64 = scmp.eq.s32.totalorder %s17, 0
      %p65 = por %p63, %p64
      %p66 = scmp.le.s32.totalorder 1, %s11
      %p67 = scmp.lt.s32.totalorder %s11, 3
      %p68 = pnand %p66, %p67
      %p69 = pneg %p68
      // Predicated region
      $region9: #{tpu_custom_call.1} parent=5 // pred_check
        _
      $region10: #{tpu_custom_call.1} parent=5 // pred_check_branch
        %71 = sbr.rel (%p68) target = $region12
      $region11: #{tpu_custom_call.1} parent=5 // pred_region
        %s72 = ssub.s32 %s11, 1
        // Predicated region
        $region13: #{tpu_custom_call.1} parent=11 // pred_check
          %p73 = pneg %p32
        $region14: #{tpu_custom_call.1} parent=11 // pred_check_branch
          %75 = sbr.rel (%p73) target = $region16
        $region15: #{tpu_custom_call.1} parent=11 // pred_region
          %77 = vsyncadd [#allocation3], 0
          %s79 = sshll.u32 %s0, 4
          %s80 = int_to_ptr.hbm [resolvable:$true] %s79
          %s81 = sshll.u32 [#allocation2], 4
          %s82 = int_to_ptr.vmem [resolvable:$true] %s81
          %84 = dma.hbm_to_vmem [thread:$0]  %s80, 128, %s82, [#allocation3]
        $region16: #{tpu_custom_call.1} parent=11 // pred_fallthru
          _
      $region12: #{tpu_custom_call.1} parent=5 // pred_fallthru
        _
      %p85 = scmp.lt.s32.totalorder %s11, 2
      // Predicated region
      $region17: #{tpu_custom_call.1} parent=5 // pred_check
        %p86 = pneg %p85
      $region18: #{tpu_custom_call.1} parent=5 // pred_check_branch
        %88 = sbr.rel (%p86) target = $region20
      $region19: #{tpu_custom_call.1} parent=5 // pred_region
        _
      $region20: #{tpu_custom_call.1} parent=5 // pred_fallthru
        _
      %p89 = scmp.le.s32.totalorder 1, %s11
      %p90 = scmp.lt.s32.totalorder %s11, 3
      %p91 = pnand %p89, %p90
      %p92 = pneg %p91
      // Predicated region
      $region21: #{tpu_custom_call.1} parent=5 // pred_check
        _
      $region22: #{tpu_custom_call.1} parent=5 // pred_check_branch
        %94 = sbr.rel (%p91) target = $region24
      $region23: #{tpu_custom_call.1} parent=5 // pred_region
        %s95 = ssub.s32 %s11, 1
        // Predicated region
        $region25: #{tpu_custom_call.1} parent=23 // pred_check
          %p96 = pneg %p32
        $region26: #{tpu_custom_call.1} parent=23 // pred_check_branch
          %98 = sbr.rel (%p96) target = $region28
        $region27: #{tpu_custom_call.1} parent=23 // pred_region
          %100 = dma.done [#allocation3], 128
        $region28: #{tpu_custom_call.1} parent=23 // pred_fallthru
          _
        %p101 = pneg %p32
        %p102 = pneg %p29
        %p103 = pneg %p58
        %p104 = pneg %p55
        %s105 = sand.u32 %s45, 1
        %s106 = scalar_lea.sflag [#allocation4], %s105
        %s107 = sand.u32 %s45, 1
        %s108 = smul.addr %s107, 8
        %s109 = scalar_lea.vmem [#allocation5], %s108
        %v110 = vld [vmem:[#allocation2] sm:$0xff]
        %111 = vst [vmem:[%s109] sm:$0xff] %v110
        %s112 = sand.u32 %s45, 1
        %s113 = scalar_lea.sflag [#allocation4], %s112
        %s114 = sand.u32 %s45, 1
        %s115 = smul.addr %s114, 8
        %s116 = scalar_lea.vmem [#allocation5], %s115
        // Predicated region
        $region29: #{tpu_custom_call.1} parent=23 // pred_check
          %p117 = pneg %p55
        $region30: #{tpu_custom_call.1} parent=23 // pred_check_branch
          %119 = sbr.rel (%p117) target = $region32
        $region31: #{tpu_custom_call.1} parent=23 // pred_region
          %121 = vsyncadd %s113, 0
          %s122 = smul.addr %s16, 8
          %s123 = scalar_lea.hbm %s1, %s122
          %s125 = sshll.u32 %s116, 4
          %s126 = int_to_ptr.vmem [resolvable:$true] %s125
          %s127 = sshll.u32 %s123, 4
          %s128 = int_to_ptr.hbm [resolvable:$true] %s127
          %130 = dma.vmem_to_hbm [thread:$0]  %s126, 128, %s128, %s113
        $region32: #{tpu_custom_call.1} parent=23 // pred_fallthru
          _
      $region24: #{tpu_custom_call.1} parent=5 // pred_fallthru
        _
      %p131 = scmp.le.s32.totalorder 2, %s11
      // Predicated region
      $region33: #{tpu_custom_call.1} parent=5 // pred_check
        %p132 = pneg %p131
      $region34: #{tpu_custom_call.1} parent=5 // pred_check_branch
        %134 = sbr.rel (%p132) target = $region36
      $region35: #{tpu_custom_call.1} parent=5 // pred_region
        %s135 = ssub.s32 %s11, 2
        // Predicated region
        $region37: #{tpu_custom_call.1} parent=35 // pred_check
          %p136 = pneg %p61
        $region38: #{tpu_custom_call.1} parent=35 // pred_check_branch
          %138 = sbr.rel (%p136) target = $region40
        $region39: #{tpu_custom_call.1} parent=35 // pred_region
          %s139 = sand.u32 %s46, 1
          %s140 = scalar_lea.sflag [#allocation4], %s139
          %s141 = sand.u32 %s46, 1
          %s142 = smul.addr %s141, 8
          %s143 = scalar_lea.vmem [#allocation5], %s142
          %145 = dma.done %s140, 128
        $region40: #{tpu_custom_call.1} parent=35 // pred_fallthru
          _
      $region36: #{tpu_custom_call.1} parent=5 // pred_fallthru
        _
    $region6: #{tpu_custom_call.1} parent=1 // loop_footer
      %s15 = sadd.s32 1, %s11
    $region7: #{tpu_custom_call.1} parent=1 // loop_footer_branch
      %10 = sbr.rel target = $region3
    $region8: #{tpu_custom_call.1} parent=1 // loop_exit
      _
    %146 = vsyncpa [#allocation3], 1
    %s147 = scalar_lea.sflag [#allocation3], 1
    %148 = vsyncpa %s147, 1
    %149 = vsyncpa [#allocation4], 1
    %s150 = scalar_lea.sflag [#allocation4], 1
    %151 = vsyncpa %s150, 1

</llo_original>
